<compile_context>
chip_gen: v6e
topology: v6e:2x2x1
jax: 0.10.0
libtpu: 0.0.40
codegen_flags: <defaults>
</compile_context>

<pallas_src>
import jax
import jax.numpy as jnp
from jax.experimental import pallas as pl
from jax.experimental.pallas import tpu as pltpu

LN_EPS = 1e-12


def _round_up(x, m):
    return ((x + m - 1) // m) * m


def bert_output_kernel(x_ref, wt_ref, b_ref, res_ref, g_ref, beta_ref, o_ref):
    # x_ref:    (tm, I)  tile of intermediate activations
    # wt_ref:   (I,  H)  dense weight, pre-transposed (grid-invariant)
    # b_ref:    (1,  H)  dense bias
    # res_ref:  (tm, H)  residual (input_tensor) tile
    # g_ref:    (1,  H)  LayerNorm gamma
    # beta_ref: (1,  H)  LayerNorm beta
    # o_ref:    (tm, H)  output tile
    h = jnp.dot(x_ref[...], wt_ref[...], preferred_element_type=jnp.float32)
    h = h + b_ref[...].astype(jnp.float32)
    # Dropout: nn.Dropout is the identity in eval/inference mode.
    h = h + res_ref[...].astype(jnp.float32)

    mean = jnp.mean(h, axis=-1, keepdims=True)
    centered = h - mean
    var = jnp.mean(centered * centered, axis=-1, keepdims=True)
    inv = jax.lax.rsqrt(var + LN_EPS)                         # EUP slot (cheap)
    scale = inv * g_ref[...].astype(jnp.float32)              # fold gamma into scale
    out = centered * scale + beta_ref[...].astype(jnp.float32)
    o_ref[...] = out.astype(o_ref.dtype)


def _const_spec(shape, single_buffer):
    # Grid-invariant operand: constant index_map; optionally single-buffered to
    # halve its VMEM footprint (the weight is the dominant static allocation).
    if single_buffer:
        return pl.BlockSpec(shape, lambda i: (0,) * len(shape),
                            pipeline_mode=pl.Buffered(1))
    return pl.BlockSpec(shape, lambda i: (0,) * len(shape))


def bert_output(hidden_states, input_tensor, wt, b, gamma, beta, *,
                tm=256, matmul_dtype=None):
    """Fused BertOutput forward (inference semantics: dropout is identity).

    hidden_states: (B, S, I)   intermediate activations
    input_tensor:  (B, S, H)   residual
    wt:            (I, H)      dense weight, already transposed from PyTorch (H, I)
    b, gamma, beta:(H,)
    tm:            tokens per grid step (multiple of 8; 128/256 at real BERT sizes).
    matmul_dtype:  optional MXU input dtype (e.g. jnp.bfloat16); accumulation and
                   the LayerNorm epilogue stay in f32.
    """
    B, S, I = hidden_states.shape
    H = input_tensor.shape[-1]
    T = B * S

    # Effective row tile: a multiple of 8, never larger than (rounded-up) T.
    tm_eff = min(tm, _round_up(T, 8))
    T_pad = _round_up(T, tm_eff)

    x = hidden_states.reshape(T, I)
    res = input_tensor.reshape(T, H)
    if T_pad != T:  # ragged T: pad rows, slice the result back afterwards
        x = jnp.pad(x, ((0, T_pad - T), (0, 0)))
        res = jnp.pad(res, ((0, T_pad - T), (0, 0)))

    if matmul_dtype is not None:
        x = x.astype(matmul_dtype)
        wt = wt.astype(matmul_dtype)

    b2 = b.reshape(1, H).astype(jnp.float32)
    g2 = gamma.reshape(1, H).astype(jnp.float32)
    beta2 = beta.reshape(1, H).astype(jnp.float32)

    out_dtype = hidden_states.dtype

    # VMEM budget: resident weight + small params + double-buffered row tiles.
    wt_bytes = I * H * jnp.dtype(wt.dtype).itemsize
    param_bytes = 3 * H * 4
    tile_bytes = (tm_eff * I * jnp.dtype(x.dtype).itemsize
                  + tm_eff * H * jnp.dtype(res.dtype).itemsize
                  + tm_eff * H * jnp.dtype(out_dtype).itemsize)
    vmem_needed = 2 * wt_bytes + 2 * param_bytes + 2 * tile_bytes + (2 << 20)
    vmem_limit = int(min(max(vmem_needed, 4 << 20), 64 << 20))

    def build(single_buffer_params):
        in_specs = [
            pl.BlockSpec((tm_eff, I), lambda i: (i, 0)),      # x tile
            _const_spec((I, H), single_buffer_params),        # weight (resident)
            _const_spec((1, H), single_buffer_params),        # bias
            pl.BlockSpec((tm_eff, H), lambda i: (i, 0)),      # residual tile
            _const_spec((1, H), single_buffer_params),        # gamma
            _const_spec((1, H), single_buffer_params),        # beta
        ]
        return pl.pallas_call(
            bert_output_kernel,
            out_shape=jax.ShapeDtypeStruct((T_pad, H), out_dtype),
            grid_spec=pltpu.PrefetchScalarGridSpec(
                num_scalar_prefetch=0,
                grid=(T_pad // tm_eff,),
                in_specs=in_specs,
                out_specs=pl.BlockSpec((tm_eff, H), lambda i: (i, 0)),
            ),
            compiler_params=pltpu.CompilerParams(
                dimension_semantics=("parallel",),
                vmem_limit_bytes=vmem_limit,
            ),
        )

    args = (x, wt, b2, res, g2, beta2)
    try:
        # Preferred: grid-invariant operands single-buffered.
        out = build(True)(*args)
    except Exception:
        # Graceful fallback if pipeline_mode=Buffered(1) is unsupported on this
        # jax/libtpu build; identical semantics, just double-buffered params.
        out = build(False)(*args)

    return out[:T].reshape(B, S, H)


def bert_output_ref(hidden_states, input_tensor, w, b, gamma, beta):
    h = jnp.einsum("bsi,hi->bsh", hidden_states, w) + b
    h = h + input_tensor
    mean = jnp.mean(h, axis=-1, keepdims=True)
    var = jnp.mean((h - mean) ** 2, axis=-1, keepdims=True)
    return (h - mean) / jnp.sqrt(var + LN_EPS) * gamma + beta


if __name__ == "__main__":
    # config: intermediate_size=64, hidden_size=32; batch=2, seq=8
    B, S, I, H = 2, 8, 64, 32

    key = jax.random.PRNGKey(0)
    k1, k2, k3, k4 = jax.random.split(key, 4)

    hidden_states = jax.random.normal(k1, (B, S, I), dtype=jnp.float32)
    input_tensor = jax.random.normal(k2, (B, S, H), dtype=jnp.float32)

    # PyTorch-layout Linear weight (H, I); transpose ONCE at parameter setup,
    # not inside the forward wrapper.
    w = jax.random.normal(k3, (H, I), dtype=jnp.float32) * (1.0 / jnp.sqrt(I))
    b = jax.random.normal(k4, (H,), dtype=jnp.float32) * 0.01
    gamma = jnp.ones((H,), dtype=jnp.float32)
    beta = jnp.zeros((H,), dtype=jnp.float32)
    wt = jnp.asarray(w.T)  # (I, H)

    out = bert_output(hidden_states, input_tensor, wt, b, gamma, beta)
    out = jax.block_until_ready(out)

    ref = bert_output_ref(hidden_states, input_tensor, w, b, gamma, beta)
    assert out.shape == (B, S, H)
    assert jnp.allclose(out, ref, atol=1e-4, rtol=1e-4)

    print("KERNEL_OK")
</pallas_src>

<mosaic_0001>
module attributes {stable_mosaic.version = 11 : i64} {
  func.func @bert_output_kernel(%arg0: i32, %arg1: memref<16x64xf32, #tpu.memory_space<vmem>>, %arg2: memref<64x32xf32, #tpu.memory_space<vmem>>, %arg3: memref<1x32xf32, #tpu.memory_space<vmem>>, %arg4: memref<16x32xf32, #tpu.memory_space<vmem>>, %arg5: memref<1x32xf32, #tpu.memory_space<vmem>>, %arg6: memref<1x32xf32, #tpu.memory_space<vmem>>, %arg7: memref<16x32xf32, #tpu.memory_space<vmem>>) attributes {dimension_semantics = [#tpu.dimension_semantics<parallel>], iteration_bounds = array<i64: 1>, scalar_prefetch = 0 : i64, scratch_operands = 0 : i64, tpu.core_type = #tpu.core_type<tc>, window_params = [{transform_indices = @transform_0, window_bounds = array<i64: 16, 64>}, {pipeline_mode = #tpu.pipeline_mode<synchronous>, transform_indices = @transform_1, window_bounds = array<i64: 64, 32>}, {pipeline_mode = #tpu.pipeline_mode<synchronous>, transform_indices = @transform_2, window_bounds = array<i64: 1, 32>}, {transform_indices = @transform_3, window_bounds = array<i64: 16, 32>}, {pipeline_mode = #tpu.pipeline_mode<synchronous>, transform_indices = @transform_4, window_bounds = array<i64: 1, 32>}, {pipeline_mode = #tpu.pipeline_mode<synchronous>, transform_indices = @transform_5, window_bounds = array<i64: 1, 32>}, {transform_indices = @transform_6, window_bounds = array<i64: 16, 32>}]} {
    %c0 = arith.constant 0 : index
    %c0_0 = arith.constant 0 : index
    %0 = vector.load %arg1[%c0, %c0_0] : memref<16x64xf32, #tpu.memory_space<vmem>>, vector<16x64xf32>
    %c0_1 = arith.constant 0 : index
    %c0_2 = arith.constant 0 : index
    %1 = vector.load %arg2[%c0_1, %c0_2] : memref<64x32xf32, #tpu.memory_space<vmem>>, vector<64x32xf32>
    %cst = arith.constant dense<0.000000e+00> : vector<16x32xf32>
    %2 = tpu.matmul %0, %1, %cst {dimension_numbers = #tpu.dot_dimension_numbers<[1], [0], [0], [1], [0, 0, 1, 1], [], []>} : vector<16x64xf32>, vector<64x32xf32>, vector<16x32xf32> -> vector<16x32xf32>
    %c0_3 = arith.constant 0 : index
    %c0_4 = arith.constant 0 : index
    %3 = vector.load %arg3[%c0_3, %c0_4] : memref<1x32xf32, #tpu.memory_space<vmem>>, vector<1x32xf32>
    %4 = vector.broadcast %3 : vector<1x32xf32> to vector<16x32xf32>
    %5 = arith.addf %2, %4 : vector<16x32xf32>
    %c0_5 = arith.constant 0 : index
    %c0_6 = arith.constant 0 : index
    %6 = vector.load %arg4[%c0_5, %c0_6] : memref<16x32xf32, #tpu.memory_space<vmem>>, vector<16x32xf32>
    %7 = arith.addf %5, %6 : vector<16x32xf32>
    %cst_7 = arith.constant dense<0.000000e+00> : vector<16xf32>
    %8 = vector.multi_reduction <add>, %7, %cst_7 [1] : vector<16x32xf32> to vector<16xf32>
    %9 = vector.shape_cast %8 : vector<16xf32> to vector<16x1xf32>
    %cst_8 = arith.constant 3.200000e+01 : f32
    %10 = vector.broadcast %cst_8 : f32 to vector<16x1xf32>
    %11 = arith.divf %9, %10 : vector<16x1xf32>
    %12 = vector.broadcast %11 : vector<16x1xf32> to vector<16x32xf32>
    %13 = arith.subf %7, %12 : vector<16x32xf32>
    %14 = arith.mulf %13, %13 : vector<16x32xf32>
    %cst_9 = arith.constant dense<0.000000e+00> : vector<16xf32>
    %15 = vector.multi_reduction <add>, %14, %cst_9 [1] : vector<16x32xf32> to vector<16xf32>
    %16 = vector.shape_cast %15 : vector<16xf32> to vector<16x1xf32>
    %cst_10 = arith.constant 3.200000e+01 : f32
    %17 = vector.broadcast %cst_10 : f32 to vector<16x1xf32>
    %18 = arith.divf %16, %17 : vector<16x1xf32>
    %cst_11 = arith.constant 9.99999996E-13 : f32
    %19 = vector.broadcast %cst_11 : f32 to vector<16x1xf32>
    %20 = arith.addf %18, %19 : vector<16x1xf32>
    %21 = math.rsqrt %20 : vector<16x1xf32>
    %c0_12 = arith.constant 0 : index
    %c0_13 = arith.constant 0 : index
    %22 = vector.load %arg5[%c0_12, %c0_13] : memref<1x32xf32, #tpu.memory_space<vmem>>, vector<1x32xf32>
    %23 = vector.broadcast %21 : vector<16x1xf32> to vector<16x32xf32>
    %24 = vector.broadcast %22 : vector<1x32xf32> to vector<16x32xf32>
    %25 = arith.mulf %23, %24 : vector<16x32xf32>
    %26 = arith.mulf %13, %25 : vector<16x32xf32>
    %c0_14 = arith.constant 0 : index
    %c0_15 = arith.constant 0 : index
    %27 = vector.load %arg6[%c0_14, %c0_15] : memref<1x32xf32, #tpu.memory_space<vmem>>, vector<1x32xf32>
    %28 = vector.broadcast %27 : vector<1x32xf32> to vector<16x32xf32>
    %29 = arith.addf %26, %28 : vector<16x32xf32>
    %c0_16 = arith.constant 0 : index
    %c0_17 = arith.constant 0 : index
    %30 = vector.load %arg7[%c0_16, %c0_17] : memref<16x32xf32, #tpu.memory_space<vmem>>, vector<16x32xf32>
    tpu.vector_store %arg7[%c0_16, %c0_17], %29 {strides = array<i32>} : memref<16x32xf32, #tpu.memory_space<vmem>>, vector<16x32xf32>,
    return
  }
  func.func @transform_0(%arg0: i32) -> (i32, i32) {
    %c0_i32 = arith.constant 0 : i32
    %c0_i32_0 = arith.constant 0 : i32
    return %arg0, %c0_i32 : i32, i32
  }
  func.func @transform_1(%arg0: i32) -> (i32, i32) {
    %c0_i32 = arith.constant 0 : i32
    %c0_i32_0 = arith.constant 0 : i32
    %c0_i32_1 = arith.constant 0 : i32
    return %c0_i32, %c0_i32_0 : i32, i32
  }
  func.func @transform_2(%arg0: i32) -> (i32, i32) {
    %c0_i32 = arith.constant 0 : i32
    %c0_i32_0 = arith.constant 0 : i32
    %c0_i32_1 = arith.constant 0 : i32
    return %c0_i32, %c0_i32_0 : i32, i32
  }
  func.func @transform_3(%arg0: i32) -> (i32, i32) {
    %c0_i32 = arith.constant 0 : i32
    %c0_i32_0 = arith.constant 0 : i32
    return %arg0, %c0_i32 : i32, i32
  }
  func.func @transform_4(%arg0: i32) -> (i32, i32) {
    %c0_i32 = arith.constant 0 : i32
    %c0_i32_0 = arith.constant 0 : i32
    %c0_i32_1 = arith.constant 0 : i32
    return %c0_i32, %c0_i32_0 : i32, i32
  }
  func.func @transform_5(%arg0: i32) -> (i32, i32) {
    %c0_i32 = arith.constant 0 : i32
    %c0_i32_0 = arith.constant 0 : i32
    %c0_i32_1 = arith.constant 0 : i32
    return %c0_i32, %c0_i32_0 : i32, i32
  }
  func.func @transform_6(%arg0: i32) -> (i32, i32) {
    %c0_i32 = arith.constant 0 : i32
    %c0_i32_0 = arith.constant 0 : i32
    return %arg0, %c0_i32 : i32, i32
  }
}

module attributes {stable_mosaic.version = 11 : i64} {
  func.func @bert_output_kernel(%arg0: i32, %arg1: memref<16x64xf32, #tpu.memory_space<vmem>>, %arg2: memref<64x32xf32, #tpu.memory_space<vmem>>, %arg3: memref<1x32xf32, #tpu.memory_space<vmem>>, %arg4: memref<16x32xf32, #tpu.memory_space<vmem>>, %arg5: memref<1x32xf32, #tpu.memory_space<vmem>>, %arg6: memref<1x32xf32, #tpu.memory_space<vmem>>, %arg7: memref<16x32xf32, #tpu.memory_space<vmem>>) attributes {dimension_semantics = [#tpu.dimension_semantics<parallel>], iteration_bounds = array<i64: 1>, scalar_prefetch = 0 : i64, scratch_operands = 0 : i64, tpu.core_type = #tpu.core_type<tc>, window_params = [{transform_indices = @transform_0, window_bounds = array<i64: 16, 64>}, {pipeline_mode = #tpu.pipeline_mode<synchronous>, transform_indices = @transform_1, window_bounds = array<i64: 64, 32>}, {pipeline_mode = #tpu.pipeline_mode<synchronous>, transform_indices = @transform_2, window_bounds = array<i64: 1, 32>}, {transform_indices = @transform_3, window_bounds = array<i64: 16, 32>}, {pipeline_mode = #tpu.pipeline_mode<synchronous>, transform_indices = @transform_4, window_bounds = array<i64: 1, 32>}, {pipeline_mode = #tpu.pipeline_mode<synchronous>, transform_indices = @transform_5, window_bounds = array<i64: 1, 32>}, {transform_indices = @transform_6, window_bounds = array<i64: 16, 32>}]} {
    %c0 = arith.constant 0 : index
    %c0_0 = arith.constant 0 : index
    %0 = vector.load %arg1[%c0, %c0_0] : memref<16x64xf32, #tpu.memory_space<vmem>>, vector<16x64xf32>
    %c0_1 = arith.constant 0 : index
    %c0_2 = arith.constant 0 : index
    %1 = vector.load %arg2[%c0_1, %c0_2] : memref<64x32xf32, #tpu.memory_space<vmem>>, vector<64x32xf32>
    %cst = arith.constant dense<0.000000e+00> : vector<16x32xf32>
    %2 = tpu.matmul %0, %1, %cst {dimension_numbers = #tpu.dot_dimension_numbers<[1], [0], [0], [1], [0, 0, 1, 1], [], []>} : vector<16x64xf32>, vector<64x32xf32>, vector<16x32xf32> -> vector<16x32xf32>
    %c0_3 = arith.constant 0 : index
    %c0_4 = arith.constant 0 : index
    %3 = vector.load %arg3[%c0_3, %c0_4] : memref<1x32xf32, #tpu.memory_space<vmem>>, vector<1x32xf32>
    %4 = vector.broadcast %3 : vector<1x32xf32> to vector<16x32xf32>
    %5 = arith.addf %2, %4 : vector<16x32xf32>
    %c0_5 = arith.constant 0 : index
    %c0_6 = arith.constant 0 : index
    %6 = vector.load %arg4[%c0_5, %c0_6] : memref<16x32xf32, #tpu.memory_space<vmem>>, vector<16x32xf32>
    %7 = arith.addf %5, %6 : vector<16x32xf32>
    %cst_7 = arith.constant dense<0.000000e+00> : vector<16xf32>
    %8 = vector.multi_reduction <add>, %7, %cst_7 [1] : vector<16x32xf32> to vector<16xf32>
    %9 = vector.shape_cast %8 : vector<16xf32> to vector<16x1xf32>
    %cst_8 = arith.constant 3.200000e+01 : f32
    %10 = vector.broadcast %cst_8 : f32 to vector<16x1xf32>
    %11 = arith.divf %9, %10 : vector<16x1xf32>
    %12 = vector.broadcast %11 : vector<16x1xf32> to vector<16x32xf32>
    %13 = arith.subf %7, %12 : vector<16x32xf32>
    %14 = arith.mulf %13, %13 : vector<16x32xf32>
    %cst_9 = arith.constant dense<0.000000e+00> : vector<16xf32>
    %15 = vector.multi_reduction <add>, %14, %cst_9 [1] : vector<16x32xf32> to vector<16xf32>
    %16 = vector.shape_cast %15 : vector<16xf32> to vector<16x1xf32>
    %cst_10 = arith.constant 3.200000e+01 : f32
    %17 = vector.broadcast %cst_10 : f32 to vector<16x1xf32>
    %18 = arith.divf %16, %17 : vector<16x1xf32>
    %cst_11 = arith.constant 9.99999996E-13 : f32
    %19 = vector.broadcast %cst_11 : f32 to vector<16x1xf32>
    %20 = arith.addf %18, %19 : vector<16x1xf32>
    %21 = math.rsqrt %20 : vector<16x1xf32>
    %c0_12 = arith.constant 0 : index
    %c0_13 = arith.constant 0 : index
    %22 = vector.load %arg5[%c0_12, %c0_13] : memref<1x32xf32, #tpu.memory_space<vmem>>, vector<1x32xf32>
    %23 = vector.broadcast %21 : vector<16x1xf32> to vector<16x32xf32>
    %24 = vector.broadcast %22 : vector<1x32xf32> to vector<16x32xf32>
    %25 = arith.mulf %23, %24 : vector<16x32xf32>
    %26 = arith.mulf %13, %25 : vector<16x32xf32>
    %c0_14 = arith.constant 0 : index
    %c0_15 = arith.constant 0 : index
    %27 = vector.load %arg6[%c0_14, %c0_15] : memref<1x32xf32, #tpu.memory_space<vmem>>, vector<1x32xf32>
    %28 = vector.broadcast %27 : vector<1x32xf32> to vector<16x32xf32>
    %29 = arith.addf %26, %28 : vector<16x32xf32>
    %c0_16 = arith.constant 0 : index
    %c0_17 = arith.constant 0 : index
    %30 = vector.load %arg7[%c0_16, %c0_17] : memref<16x32xf32, #tpu.memory_space<vmem>>, vector<16x32xf32>
    tpu.vector_store %arg7[%c0_16, %c0_17], %29 {strides = array<i32>} : memref<16x32xf32, #tpu.memory_space<vmem>>, vector<16x32xf32>,
    return
  }
  func.func @transform_0(%arg0: i32) -> (i32, i32) {
    %c0_i32 = arith.constant 0 : i32
    %c0_i32_0 = arith.constant 0 : i32
    return %arg0, %c0_i32 : i32, i32
  }
  func.func @transform_1(%arg0: i32) -> (i32, i32) {
    %c0_i32 = arith.constant 0 : i32
    %c0_i32_0 = arith.constant 0 : i32
    %c0_i32_1 = arith.constant 0 : i32
    return %c0_i32, %c0_i32_0 : i32, i32
  }
  func.func @transform_2(%arg0: i32) -> (i32, i32) {
    %c0_i32 = arith.constant 0 : i32
    %c0_i32_0 = arith.constant 0 : i32
    %c0_i32_1 = arith.constant 0 : i32
    return %c0_i32, %c0_i32_0 : i32, i32
  }
  func.func @transform_3(%arg0: i32) -> (i32, i32) {
    %c0_i32 = arith.constant 0 : i32
    %c0_i32_0 = arith.constant 0 : i32
    return %arg0, %c0_i32 : i32, i32
  }
  func.func @transform_4(%arg0: i32) -> (i32, i32) {
    %c0_i32 = arith.constant 0 : i32
    %c0_i32_0 = arith.constant 0 : i32
    %c0_i32_1 = arith.constant 0 : i32
    return %c0_i32, %c0_i32_0 : i32, i32
  }
  func.func @transform_5(%arg0: i32) -> (i32, i32) {
    %c0_i32 = arith.constant 0 : i32
    %c0_i32_0 = arith.constant 0 : i32
    %c0_i32_1 = arith.constant 0 : i32
    return %c0_i32, %c0_i32_0 : i32, i32
  }
  func.func @transform_6(%arg0: i32) -> (i32, i32) {
    %c0_i32 = arith.constant 0 : i32
    %c0_i32_0 = arith.constant 0 : i32
    return %arg0, %c0_i32 : i32, i32
  }
}

</mosaic_0001>

<llo_original>
// kernel: tpu_custom_call.1
$region0: #{tpu_custom_call.1}
  #allocation0 [shape = 'u32[]', space=smem, size = 0x4, offset = 0x4, fixed_abs, tag = 'smem constant byte address 0x4 - core index']
  #allocation1 [shape = 'u32[144,128]{1,0:T(1,128)}', space=vmem, size = 0x12000, scoped, tag = 'internal scratch']
  %s0 = inlined_call_operand.vmem [shape: f32[16,64], index: 0, kind: input, shape index: {}]
  %s1 = inlined_call_operand.vmem [shape: f32[64,32], index: 1, kind: input, shape index: {}]
  %s2 = inlined_call_operand.vmem [shape: f32[1,32], index: 2, kind: input, shape index: {}]
  %s3 = inlined_call_operand.vmem [shape: f32[16,32], index: 3, kind: input, shape index: {}]
  %s4 = inlined_call_operand.vmem [shape: f32[1,32], index: 4, kind: input, shape index: {}]
  %s5 = inlined_call_operand.vmem [shape: f32[1,32], index: 5, kind: input, shape index: {}]
  %s6 = inlined_call_operand.hbm [shape: f32[16,32], index: 6, kind: output, shape index: {}]
  %s7 = sld [smem:[#allocation0]]
  $region34: #{tpu_custom_call.1} parent=0
    _
  %s9 = ssub.s32 1, %s7
  %s10 = scalar_select 0, %s9, %s7
  $region1: #{tpu_custom_call.1} parent=0
    #allocation2 [shape = 'u8[8192]{0}', space=vmem, size = 0x2000, scoped, tag = 'output window, operand 0, single buffered']
    #allocation3 [shape = 's32[1]{0}', space=sflag, size = 0x4, scoped, tag = 'scoped memory for tpu_custom_call.1']
    %11 = vsyncpa [#allocation3], 0
    // Predicated region
    $region2: #{tpu_custom_call.1} parent=1 // pred_check
      _
    $region3: #{tpu_custom_call.1} parent=1 // pred_check_branch
      %13 = sbr.rel (0) target = $region5
    $region4: #{tpu_custom_call.1} parent=1 // pred_region
      _
    $region5: #{tpu_custom_call.1} parent=1 // pred_fallthru
      _
    // Predicated region
    $region6: #{tpu_custom_call.1} parent=1 // pred_check
      _
    $region7: #{tpu_custom_call.1} parent=1 // pred_check_branch
      %15 = sbr.rel (0) target = $region9
    $region8: #{tpu_custom_call.1} parent=1 // pred_region
      _
    $region9: #{tpu_custom_call.1} parent=1 // pred_fallthru
      _
    // Predicated region
    $region10: #{tpu_custom_call.1} parent=1 // pred_check
      _
    $region11: #{tpu_custom_call.1} parent=1 // pred_check_branch
      %17 = sbr.rel (0) target = $region13
    $region12: #{tpu_custom_call.1} parent=1 // pred_region
      _
    $region13: #{tpu_custom_call.1} parent=1 // pred_fallthru
      _
    // Predicated region
    $region14: #{tpu_custom_call.1} parent=1 // pred_check
      _
    $region15: #{tpu_custom_call.1} parent=1 // pred_check_branch
      %19 = sbr.rel (0) target = $region17
    $region16: #{tpu_custom_call.1} parent=1 // pred_region
      _
    $region17: #{tpu_custom_call.1} parent=1 // pred_fallthru
      _
    // Predicated region
    $region18: #{tpu_custom_call.1} parent=1 // pred_check
      _
    $region19: #{tpu_custom_call.1} parent=1 // pred_check_branch
      %21 = sbr.rel (0) target = $region21
    $region20: #{tpu_custom_call.1} parent=1 // pred_region
      _
    $region21: #{tpu_custom_call.1} parent=1 // pred_fallthru
      _
    // Predicated region
    $region22: #{tpu_custom_call.1} parent=1 // pred_check
      _
    $region23: #{tpu_custom_call.1} parent=1 // pred_check_branch
      %23 = sbr.rel (0) target = $region25
    $region24: #{tpu_custom_call.1} parent=1 // pred_region
      _
    $region25: #{tpu_custom_call.1} parent=1 // pred_fallthru
      _
    %v24 = vld [vmem:[%s0] sm:$0xff]
    %v25 = vld [vmem:[%s0 + $0x8] sm:$0xff]
    %v26 = vld [vmem:[%s1] sm:$0xff]
    %v27 = vld [vmem:[%s1 + $0x8] sm:$0xff]
    %v28 = vld [vmem:[%s1 + $0x10] sm:$0xff]
    %v29 = vld [vmem:[%s1 + $0x18] sm:$0xff]
    %v30 = vld [vmem:[%s1 + $0x20] sm:$0xff]
    %v31 = vld [vmem:[%s1 + $0x28] sm:$0xff]
    %v32 = vld [vmem:[%s1 + $0x30] sm:$0xff]
    %v33 = vld [vmem:[%s1 + $0x38] sm:$0xff]
    %v34 = vld [vmem:[%s2] sm:$0x1]
    %v36 = vlaneseq
    %v37 = vshrl.u32 %v36, 7
    %v38 = vsub.s32 0, %v37
    %v39 = vrot.slane %v34, %v38
    %vm41 = vcmask 523264
    %v43 = vsel %vm41, %v24, 0
    %v46 = vsel %vm41, %v25, 0
    %48 = vmatprep.subr.mxu0 0.0
    %49 = vmatpush1.msra.mxu0 0.0
    %50 = vmatprep.subr.mxu0 0.0
    %51 = vmatpush1.msra.mxu0 0.0
    %52 = vmatprep.subr.mxu0 0.0
    %53 = vmatpush1.msra.mxu0 0.0
    %54 = vmatprep.subr.mxu0 0.0
    %55 = vmatpush1.msra.mxu0 0.0
    %56 = vmatprep.subr.mxu0 0.0
    %57 = vmatpush1.msra.mxu0 0.0
    %58 = vmatprep.subr.mxu0 0.0
    %59 = vmatpush1.msra.mxu0 0.0
    %60 = vmatprep.subr.mxu0 0.0
    %61 = vmatpush1.msra.mxu0 0.0
    %62 = vmatprep.subr.mxu0 0.0
    %63 = vmatpush1.msra.mxu0 0.0
    %64 = vmatprep.subr.mxu0 0.0
    %65 = vmatpush1.msra.mxu0 %v33
    %66 = vmatprep.subr.mxu0 0.0
    %67 = vmatpush1.msra.mxu0 %v32
    %68 = vmatprep.subr.mxu0 0.0
    %69 = vmatpush1.msra.mxu0 %v31
    %70 = vmatprep.subr.mxu0 0.0
    %71 = vmatpush1.msra.mxu0 %v30
    %72 = vmatprep.subr.mxu0 0.0
    %73 = vmatpush1.msra.mxu0 %v29
    %74 = vmatprep.subr.mxu0 0.0
    %75 = vmatpush1.msra.mxu0 %v28
    %76 = vmatprep.subr.mxu0 0.0
    %77 = vmatpush1.msra.mxu0 %v27
    %78 = vmatprep.subr.mxu0 0.0
    %79 = vmatpush1.msra.mxu0 %v26
    %80 = vmatprep.subr.mxu0 0.0
    %81 = vmatpush2.msra.mxu0 0.0
    %82 = vmatprep.subr.mxu0 0.0
    %83 = vmatpush2.msra.mxu0 0.0
    %84 = vmatprep.subr.mxu0 0.0
    %85 = vmatpush2.msra.mxu0 0.0
    %86 = vmatprep.subr.mxu0 0.0
    %87 = vmatpush2.msra.mxu0 0.0
    %88 = vmatprep.subr.mxu0 0.0
    %89 = vmatpush2.msra.mxu0 0.0
    %90 = vmatprep.subr.mxu0 0.0
    %91 = vmatpush2.msra.mxu0 0.0
    %92 = vmatprep.subr.mxu0 0.0
    %93 = vmatpush2.msra.mxu0 0.0
    %94 = vmatprep.subr.mxu0 0.0
    %95 = vmatpush2.msra.mxu0 0.0
    %96 = vmatprep.subr.mxu0 0.0
    %97 = vmatpush2.msra.mxu0 0.0
    %98 = vmatprep.subr.mxu0 0.0
    %99 = vmatpush2.msra.mxu0 0.0
    %100 = vmatprep.subr.mxu0 0.0
    %101 = vmatpush2.msra.mxu0 0.0
    %102 = vmatprep.subr.mxu0 0.0
    %103 = vmatpush2.msra.mxu0 0.0
    %104 = vmatprep.subr.mxu0 0.0
    %105 = vmatpush2.msra.mxu0 0.0
    %106 = vmatprep.subr.mxu0 0.0
    %107 = vmatpush2.msra.mxu0 0.0
    %108 = vmatprep.subr.mxu0 0.0
    %109 = vmatpush2.msra.mxu0 0.0
    %110 = vmatprep.subr.mxu0 0.0
    %111 = vmatpush2.msra.mxu0 0.0
    %112 = vmatprep.mubr.f32.mxu0 0.0
    %113 = vmatmul.mubr.f32.gmra.mxu0 %v43
    %v114 = vpop.f32.mrf.mxu0
    %v115 = vadd.f32 %v39, %v114
    %v116 = vpop.f32.mrf.mxu0
    %117 = vmatprep.mubr.f32.mxu0 0.0
    %118 = vmatmul.mubr.f32.gmra.mxu0 %v46
    %v119 = vpop.f32.mrf.mxu0
    %v120 = vadd.f32 %v39, %v119
    %v121 = vpop.f32.mrf.mxu0
    %122 = vdwg.mxu0
    %v123 = vld [vmem:[%s3] sm:$0xff]
    %v124 = vld [vmem:[%s3 + $0x8] sm:$0xff]
    %v125 = vadd.f32 %v115, %v123
    %v126 = vadd.f32 %v120, %v124
    %vm127 = vcmask 261120
    %v128 = vsel %vm127, %v125, 0.0
    %129 = vadd.xlane.f32.xlu0 %v128
    %v130 = vpop.xlane.xlu0 %129
    %v131 = vsel %vm127, %v126, 0.0
    %132 = vadd.xlane.f32.xlu0 %v131
    %v133 = vpop.xlane.xlu0 %132
    %v134 = vrcp.pop 32.0
    %v135 = vmul.f32 %v130, %v134
    %v136 = vmul.f32 %v133, %v134
    %v137 = vsub.f32 %v125, %v135
    %v138 = vsub.f32 %v126, %v136
    %v139 = vmul.f32 %v137, %v137
    %v140 = vmul.f32 %v138, %v138
    %v141 = vsel %vm127, %v139, 0.0
    %142 = vadd.xlane.f32.xlu0 %v141
    %v143 = vpop.xlane.xlu0 %142
    %v144 = vsel %vm127, %v140, 0.0
    %145 = vadd.xlane.f32.xlu0 %v144
    %v146 = vpop.xlane.xlu0 %145
    %v147 = vmul.f32 %v143, %v134
    %v148 = vmul.f32 %v146, %v134
    %v149 = vadd.f32 %v147, 1e-12
    %v150 = vadd.f32 %v148, 1e-12
    %v151 = vrsqrt.pop %v149
    %v152 = vrsqrt.pop %v150
    %v153 = vld [vmem:[%s4] sm:$0x1]
    %v155 = vlaneseq
    %v156 = vshrl.u32 %v155, 7
    %v157 = vsub.s32 0, %v156
    %v158 = vrot.slane %v153, %v157
    %v160 = vmul.f32 %v151, %v158
    %v161 = vmul.f32 %v152, %v158
    %v162 = vmul.f32 %v137, %v160
    %v163 = vmul.f32 %v138, %v161
    %v164 = vld [vmem:[%s5] sm:$0x1]
    %v166 = vlaneseq
    %v167 = vshrl.u32 %v166, 7
    %v168 = vsub.s32 0, %v167
    %v169 = vrot.slane %v164, %v168
    %v171 = vadd.f32 %v162, %v169
    %v172 = vadd.f32 %v163, %v169
    %173 = vst.msk [vmem:[#allocation2] sm:$0xff] %vm127, %v171
    %174 = vst.msk [vmem:[#allocation2 + $0x8] sm:$0xff] %vm127, %v172
    // Predicated region
    $region26: #{tpu_custom_call.1} parent=1 // pred_check
      _
    $region27: #{tpu_custom_call.1} parent=1 // pred_check_branch
      %176 = sbr.rel (0) target = $region29
    $region28: #{tpu_custom_call.1} parent=1 // pred_region
      %s178 = ssub.s32 256, 256
      %179 = vsyncadd [#allocation3], %s178
      %s180 = sshll.u32 [#allocation2], 4
      %s181 = int_to_ptr.vmem [resolvable:$true] %s180
      %186 = dma.vmem_to_hbm [thread:$0]  %s181, 256, %s6, [#allocation3], 128, 128, 8
    $region29: #{tpu_custom_call.1} parent=1 // pred_fallthru
      _
    // Predicated region
    $region30: #{tpu_custom_call.1} parent=1 // pred_check
      _
    $region31: #{tpu_custom_call.1} parent=1 // pred_check_branch
      %188 = sbr.rel (0) target = $region33
    $region32: #{tpu_custom_call.1} parent=1 // pred_region
      %189 = dma.done [#allocation3], 256
    $region33: #{tpu_custom_call.1} parent=1 // pred_fallthru
      _
    %190 = vsyncpa [#allocation3], 1

// kernel: tpu_custom_call.1
$region0: #{tpu_custom_call.1}
  #allocation0 [shape = 'u32[]', space=smem, size = 0x4, offset = 0x4, fixed_abs, tag = 'smem constant byte address 0x4 - core index']
  #allocation1 [shape = 'u32[144,128]{1,0:T(1,128)}', space=vmem, size = 0x12000, scoped, tag = 'internal scratch']
  %s0 = inlined_call_operand.vmem [shape: f32[16,64], index: 0, kind: input, shape index: {}]
  %s1 = inlined_call_operand.vmem [shape: f32[64,32], index: 1, kind: input, shape index: {}]
  %s2 = inlined_call_operand.vmem [shape: f32[1,32], index: 2, kind: input, shape index: {}]
  %s3 = inlined_call_operand.vmem [shape: f32[16,32], index: 3, kind: input, shape index: {}]
  %s4 = inlined_call_operand.vmem [shape: f32[1,32], index: 4, kind: input, shape index: {}]
  %s5 = inlined_call_operand.vmem [shape: f32[1,32], index: 5, kind: input, shape index: {}]
  %s6 = inlined_call_operand.hbm [shape: f32[16,32], index: 6, kind: output, shape index: {}]
  %s7 = sld [smem:[#allocation0]]
  $region34: #{tpu_custom_call.1} parent=0
    _
  %s9 = ssub.s32 1, %s7
  %s10 = scalar_select 0, %s9, %s7
  $region1: #{tpu_custom_call.1} parent=0
    #allocation2 [shape = 'u8[8192]{0}', space=vmem, size = 0x2000, scoped, tag = 'output window, operand 0, single buffered']
    #allocation3 [shape = 's32[1]{0}', space=sflag, size = 0x4, scoped, tag = 'scoped memory for tpu_custom_call.1']
    %11 = vsyncpa [#allocation3], 0
    // Predicated region
    $region2: #{tpu_custom_call.1} parent=1 // pred_check
      _
    $region3: #{tpu_custom_call.1} parent=1 // pred_check_branch
      %13 = sbr.rel (0) target = $region5
    $region4: #{tpu_custom_call.1} parent=1 // pred_region
      _
    $region5: #{tpu_custom_call.1} parent=1 // pred_fallthru
      _
    // Predicated region
    $region6: #{tpu_custom_call.1} parent=1 // pred_check
      _
    $region7: #{tpu_custom_call.1} parent=1 // pred_check_branch
      %15 = sbr.rel (0) target = $region9
    $region8: #{tpu_custom_call.1} parent=1 // pred_region
      _
    $region9: #{tpu_custom_call.1} parent=1 // pred_fallthru
      _
    // Predicated region
    $region10: #{tpu_custom_call.1} parent=1 // pred_check
      _
    $region11: #{tpu_custom_call.1} parent=1 // pred_check_branch
      %17 = sbr.rel (0) target = $region13
    $region12: #{tpu_custom_call.1} parent=1 // pred_region
      _
    $region13: #{tpu_custom_call.1} parent=1 // pred_fallthru
      _
    // Predicated region
    $region14: #{tpu_custom_call.1} parent=1 // pred_check
      _
    $region15: #{tpu_custom_call.1} parent=1 // pred_check_branch
      %19 = sbr.rel (0) target = $region17
    $region16: #{tpu_custom_call.1} parent=1 // pred_region
      _
    $region17: #{tpu_custom_call.1} parent=1 // pred_fallthru
      _
    // Predicated region
    $region18: #{tpu_custom_call.1} parent=1 // pred_check
      _
    $region19: #{tpu_custom_call.1} parent=1 // pred_check_branch
      %21 = sbr.rel (0) target = $region21
    $region20: #{tpu_custom_call.1} parent=1 // pred_region
      _
    $region21: #{tpu_custom_call.1} parent=1 // pred_fallthru
      _
    // Predicated region
    $region22: #{tpu_custom_call.1} parent=1 // pred_check
      _
    $region23: #{tpu_custom_call.1} parent=1 // pred_check_branch
      %23 = sbr.rel (0) target = $region25
    $region24: #{tpu_custom_call.1} parent=1 // pred_region
      _
    $region25: #{tpu_custom_call.1} parent=1 // pred_fallthru
      _
    %v24 = vld [vmem:[%s0] sm:$0xff]
    %v25 = vld [vmem:[%s0 + $0x8] sm:$0xff]
    %v26 = vld [vmem:[%s1] sm:$0xff]
    %v27 = vld [vmem:[%s1 + $0x8] sm:$0xff]
    %v28 = vld [vmem:[%s1 + $0x10] sm:$0xff]
    %v29 = vld [vmem:[%s1 + $0x18] sm:$0xff]
    %v30 = vld [vmem:[%s1 + $0x20] sm:$0xff]
    %v31 = vld [vmem:[%s1 + $0x28] sm:$0xff]
    %v32 = vld [vmem:[%s1 + $0x30] sm:$0xff]
    %v33 = vld [vmem:[%s1 + $0x38] sm:$0xff]
    %v34 = vld [vmem:[%s2] sm:$0x1]
    %v36 = vlaneseq
    %v37 = vshrl.u32 %v36, 7
    %v38 = vsub.s32 0, %v37
    %v39 = vrot.slane %v34, %v38
    %vm41 = vcmask 523264
    %v43 = vsel %vm41, %v24, 0
    %v46 = vsel %vm41, %v25, 0
    %48 = vmatprep.subr.mxu0 0.0
    %49 = vmatpush1.msra.mxu0 0.0
    %50 = vmatprep.subr.mxu0 0.0
    %51 = vmatpush1.msra.mxu0 0.0
    %52 = vmatprep.subr.mxu0 0.0
    %53 = vmatpush1.msra.mxu0 0.0
    %54 = vmatprep.subr.mxu0 0.0
    %55 = vmatpush1.msra.mxu0 0.0
    %56 = vmatprep.subr.mxu0 0.0
    %57 = vmatpush1.msra.mxu0 0.0
    %58 = vmatprep.subr.mxu0 0.0
    %59 = vmatpush1.msra.mxu0 0.0
    %60 = vmatprep.subr.mxu0 0.0
    %61 = vmatpush1.msra.mxu0 0.0
    %62 = vmatprep.subr.mxu0 0.0
    %63 = vmatpush1.msra.mxu0 0.0
    %64 = vmatprep.subr.mxu0 0.0
    %65 = vmatpush1.msra.mxu0 %v33
    %66 = vmatprep.subr.mxu0 0.0
    %67 = vmatpush1.msra.mxu0 %v32
    %68 = vmatprep.subr.mxu0 0.0
    %69 = vmatpush1.msra.mxu0 %v31
    %70 = vmatprep.subr.mxu0 0.0
    %71 = vmatpush1.msra.mxu0 %v30
    %72 = vmatprep.subr.mxu0 0.0
    %73 = vmatpush1.msra.mxu0 %v29
    %74 = vmatprep.subr.mxu0 0.0
    %75 = vmatpush1.msra.mxu0 %v28
    %76 = vmatprep.subr.mxu0 0.0
    %77 = vmatpush1.msra.mxu0 %v27
    %78 = vmatprep.subr.mxu0 0.0
    %79 = vmatpush1.msra.mxu0 %v26
    %80 = vmatprep.subr.mxu0 0.0
    %81 = vmatpush2.msra.mxu0 0.0
    %82 = vmatprep.subr.mxu0 0.0
    %83 = vmatpush2.msra.mxu0 0.0
    %84 = vmatprep.subr.mxu0 0.0
    %85 = vmatpush2.msra.mxu0 0.0
    %86 = vmatprep.subr.mxu0 0.0
    %87 = vmatpush2.msra.mxu0 0.0
    %88 = vmatprep.subr.mxu0 0.0
    %89 = vmatpush2.msra.mxu0 0.0
    %90 = vmatprep.subr.mxu0 0.0
    %91 = vmatpush2.msra.mxu0 0.0
    %92 = vmatprep.subr.mxu0 0.0
    %93 = vmatpush2.msra.mxu0 0.0
    %94 = vmatprep.subr.mxu0 0.0
    %95 = vmatpush2.msra.mxu0 0.0
    %96 = vmatprep.subr.mxu0 0.0
    %97 = vmatpush2.msra.mxu0 0.0
    %98 = vmatprep.subr.mxu0 0.0
    %99 = vmatpush2.msra.mxu0 0.0
    %100 = vmatprep.subr.mxu0 0.0
    %101 = vmatpush2.msra.mxu0 0.0
    %102 = vmatprep.subr.mxu0 0.0
    %103 = vmatpush2.msra.mxu0 0.0
    %104 = vmatprep.subr.mxu0 0.0
    %105 = vmatpush2.msra.mxu0 0.0
    %106 = vmatprep.subr.mxu0 0.0
    %107 = vmatpush2.msra.mxu0 0.0
    %108 = vmatprep.subr.mxu0 0.0
    %109 = vmatpush2.msra.mxu0 0.0
    %110 = vmatprep.subr.mxu0 0.0
    %111 = vmatpush2.msra.mxu0 0.0
    %112 = vmatprep.mubr.f32.mxu0 0.0
    %113 = vmatmul.mubr.f32.gmra.mxu0 %v43
    %v114 = vpop.f32.mrf.mxu0
    %v115 = vadd.f32 %v39, %v114
    %v116 = vpop.f32.mrf.mxu0
    %117 = vmatprep.mubr.f32.mxu0 0.0
    %118 = vmatmul.mubr.f32.gmra.mxu0 %v46
    %v119 = vpop.f32.mrf.mxu0
    %v120 = vadd.f32 %v39, %v119
    %v121 = vpop.f32.mrf.mxu0
    %122 = vdwg.mxu0
    %v123 = vld [vmem:[%s3] sm:$0xff]
    %v124 = vld [vmem:[%s3 + $0x8] sm:$0xff]
    %v125 = vadd.f32 %v115, %v123
    %v126 = vadd.f32 %v120, %v124
    %vm127 = vcmask 261120
    %v128 = vsel %vm127, %v125, 0.0
    %129 = vadd.xlane.f32.xlu0 %v128
    %v130 = vpop.xlane.xlu0 %129
    %v131 = vsel %vm127, %v126, 0.0
    %132 = vadd.xlane.f32.xlu0 %v131
    %v133 = vpop.xlane.xlu0 %132
    %v134 = vrcp.pop 32.0
    %v135 = vmul.f32 %v130, %v134
    %v136 = vmul.f32 %v133, %v134
    %v137 = vsub.f32 %v125, %v135
    %v138 = vsub.f32 %v126, %v136
    %v139 = vmul.f32 %v137, %v137
    %v140 = vmul.f32 %v138, %v138
    %v141 = vsel %vm127, %v139, 0.0
    %142 = vadd.xlane.f32.xlu0 %v141
    %v143 = vpop.xlane.xlu0 %142
    %v144 = vsel %vm127, %v140, 0.0
    %145 = vadd.xlane.f32.xlu0 %v144
    %v146 = vpop.xlane.xlu0 %145
    %v147 = vmul.f32 %v143, %v134
    %v148 = vmul.f32 %v146, %v134
    %v149 = vadd.f32 %v147, 1e-12
    %v150 = vadd.f32 %v148, 1e-12
    %v151 = vrsqrt.pop %v149
    %v152 = vrsqrt.pop %v150
    %v153 = vld [vmem:[%s4] sm:$0x1]
    %v155 = vlaneseq
    %v156 = vshrl.u32 %v155, 7
    %v157 = vsub.s32 0, %v156
    %v158 = vrot.slane %v153, %v157
    %v160 = vmul.f32 %v151, %v158
    %v161 = vmul.f32 %v152, %v158
    %v162 = vmul.f32 %v137, %v160
    %v163 = vmul.f32 %v138, %v161
    %v164 = vld [vmem:[%s5] sm:$0x1]
    %v166 = vlaneseq
    %v167 = vshrl.u32 %v166, 7
    %v168 = vsub.s32 0, %v167
    %v169 = vrot.slane %v164, %v168
    %v171 = vadd.f32 %v162, %v169
    %v172 = vadd.f32 %v163, %v169
    %173 = vst.msk [vmem:[#allocation2] sm:$0xff] %vm127, %v171
    %174 = vst.msk [vmem:[#allocation2 + $0x8] sm:$0xff] %vm127, %v172
    // Predicated region
    $region26: #{tpu_custom_call.1} parent=1 // pred_check
      _
    $region27: #{tpu_custom_call.1} parent=1 // pred_check_branch
      %176 = sbr.rel (0) target = $region29
    $region28: #{tpu_custom_call.1} parent=1 // pred_region
      %s178 = ssub.s32 256, 256
      %179 = vsyncadd [#allocation3], %s178
      %s180 = sshll.u32 [#allocation2], 4
      %s181 = int_to_ptr.vmem [resolvable:$true] %s180
      %186 = dma.vmem_to_hbm [thread:$0]  %s181, 256, %s6, [#allocation3], 128, 128, 8
    $region29: #{tpu_custom_call.1} parent=1 // pred_fallthru
      _
    // Predicated region
    $region30: #{tpu_custom_call.1} parent=1 // pred_check
      _
    $region31: #{tpu_custom_call.1} parent=1 // pred_check_branch
      %188 = sbr.rel (0) target = $region33
    $region32: #{tpu_custom_call.1} parent=1 // pred_region
      %189 = dma.done [#allocation3], 256
    $region33: #{tpu_custom_call.1} parent=1 // pred_fallthru
      _
    %190 = vsyncpa [#allocation3], 1

</llo_original>
